<compile_context>
chip_gen: v7x
topology: tpu7x:2x2x1
jax: 0.10.0
libtpu: 0.0.40
codegen_flags: <defaults>
</compile_context>

<pallas_src>
import functools

import jax
import jax.numpy as jnp
from jax import lax
from jax.experimental import pallas as pl
from jax.experimental.pallas import tpu as pltpu

_LANES = 128
_SUBLANES = 8


def _round_up(x: int, m: int) -> int:
    return ((x + m - 1) // m) * m


def _cdiv(a: int, b: int) -> int:
    return (a + b - 1) // b


def _vmem_capacity_bytes() -> int:
    try:
        return int(getattr(pltpu.get_tpu_info(), "vmem_capacity_bytes", 64 << 20))
    except Exception:
        return 64 << 20  # conservative fallback (v7x physical VMEM)


def _r2_stats_kernel(shift_ref, labels_ref, preds_ref, out_ref,
                     sse_acc, s1_acc, s2_acc, *,
                     block_rows: int, steps: int, num_blocks: int,
                     full_rows: int, rem_lanes: int):
    i = pl.program_id(0)              # split (parallel; one per TC on v7x)
    j = pl.program_id(1)              # step within split (reduction axis)
    gb = i * steps + j                # global block index (unclamped)

    @pl.when(j == 0)
    def _init():
        sse_acc[...] = jnp.zeros_like(sse_acc)
        s1_acc[...] = jnp.zeros_like(s1_acc)
        s2_acc[...] = jnp.zeros_like(s2_acc)

    shift = shift_ref[0]              # constant shift for stable variance

    def accumulate(valid):
        lab = labels_ref[...].astype(jnp.float32)
        prd = preds_ref[...].astype(jnp.float32)
        diff = prd - lab
        lab_c = lab - shift
        if valid is not None:
            diff = jnp.where(valid, diff, 0.0)
            lab_c = jnp.where(valid, lab_c, 0.0)
        g = block_rows // _SUBLANES
        # Layout-preserving sublane regroup; sums are pure VPU vadds.
        d3 = diff.reshape(g, _SUBLANES, _LANES)
        l3 = lab_c.reshape(g, _SUBLANES, _LANES)
        sse_acc[...] += jnp.sum(d3 * d3, axis=0)
        s1_acc[...] += jnp.sum(l3, axis=0)
        s2_acc[...] += jnp.sum(l3 * l3, axis=0)

    # Full blocks: entirely valid data, no masking (fast path).
    @pl.when(gb < num_blocks - 1)
    def _full_block():
        accumulate(None)

    # Tail block (and the clamped duplicate block if the grid overshoots):
    # element-granular mask against the true element count.
    @pl.when(gb >= num_blocks - 1)
    def _tail_block():
        row_ids = lax.broadcasted_iota(jnp.int32, (block_rows, _LANES), 0)
        grow = gb * block_rows + row_ids
        valid = grow < full_rows
        if rem_lanes:
            lane_ids = lax.broadcasted_iota(jnp.int32, (block_rows, _LANES), 1)
            valid = valid | ((grow == full_rows) & (lane_ids < rem_lanes))
        accumulate(valid)

    @pl.when(j == pl.num_programs(1) - 1)
    def _finalize():
        out_ref[0, 0, :, :] = sse_acc[...]
        out_ref[0, 1, :, :] = s1_acc[...]
        out_ref[0, 2, :, :] = s2_acc[...]


def r2_loss(labels: jax.Array, preds: jax.Array) -> jax.Array:
    """sum((preds-labels)^2) / sum((labels-mean(labels))^2) as an f32 scalar."""
    assert labels.shape == preds.shape
    total = int(labels.size)
    assert total > 0
    n_itemsize = labels.dtype.itemsize + preds.dtype.itemsize

    labels_flat = labels.reshape(-1)
    preds_flat = preds.reshape(-1)
    # Shift constant (labels[0]) for numerically stable shifted statistics.
    shift = labels_flat[:1].astype(jnp.float32)

    rows = _cdiv(total, _LANES)
    rows_p = max(rows, _SUBLANES)
    padded_total = rows_p * _LANES
    if padded_total != total:
        # Only up to the next 128-element row (plus a minimum of 8 rows for
        # tiny inputs).  Pad contents are masked in-kernel, never trusted.
        pad = padded_total - total
        labels_flat = jnp.pad(labels_flat, (0, pad))
        preds_flat = jnp.pad(preds_flat, (0, pad))
    labels2d = labels_flat.reshape(rows_p, _LANES)
    preds2d = preds_flat.reshape(rows_p, _LANES)

    # Generation-aware block size: keep 2 inputs x 2 buffers under ~1/4 VMEM.
    vmem_cap = _vmem_capacity_bytes()
    bytes_per_row = _LANES * max(labels.dtype.itemsize, preds.dtype.itemsize)
    max_block_rows = max(_SUBLANES,
                         min(32768,
                             (vmem_cap // 16 // bytes_per_row)
                             // _SUBLANES * _SUBLANES))
    if rows_p <= 64:
        block_rows = _round_up(rows_p, _SUBLANES)
    else:
        # Aim for >=4 blocks so DMA/compute overlap and the 2-core split engage.
        block_rows = max(_SUBLANES,
                         min(max_block_rows,
                             _round_up(_cdiv(rows_p, 4), _SUBLANES)))

    num_blocks = _cdiv(rows_p, block_rows)
    n_splits = 2 if num_blocks >= 2 else 1      # 2 TensorCores on v7x
    steps = _cdiv(num_blocks, n_splits)

    full_rows = total // _LANES                 # fully-valid 128-wide rows
    rem_lanes = total - full_rows * _LANES      # valid lanes in the last row

    kernel = functools.partial(
        _r2_stats_kernel, block_rows=block_rows, steps=steps,
        num_blocks=num_blocks, full_rows=full_rows, rem_lanes=rem_lanes)

    def in_map(i, j):
        # Clamp the (at most one) overshoot block; its contribution is masked.
        return (jnp.minimum(i * steps + j, num_blocks - 1), 0)

    pipeline_bytes = 2 * block_rows * _LANES * n_itemsize     # 2 buffers, both inputs
    vmem_limit = int(min(vmem_cap * 3 // 4, pipeline_bytes + (4 << 20)))

    cost = pl.CostEstimate(
        flops=9 * total, transcendentals=0,
        bytes_accessed=total * n_itemsize + n_splits * 3 * _SUBLANES * _LANES * 4)

    partials = pl.pallas_call(
        kernel,
        out_shape=jax.ShapeDtypeStruct((n_splits, 3, _SUBLANES, _LANES), jnp.float32),
        grid_spec=pltpu.PrefetchScalarGridSpec(
            num_scalar_prefetch=0,
            grid=(n_splits, steps),
            in_specs=[
                pl.BlockSpec(memory_space=pltpu.MemorySpace.SMEM),   # shift (1,)
                pl.BlockSpec((block_rows, _LANES), in_map),          # labels
                pl.BlockSpec((block_rows, _LANES), in_map),          # preds
            ],
            out_specs=pl.BlockSpec((1, 3, _SUBLANES, _LANES),
                                   lambda i, j: (i, 0, 0, 0)),
            scratch_shapes=[pltpu.VMEM((_SUBLANES, _LANES), jnp.float32)] * 3,
        ),
        compiler_params=pltpu.CompilerParams(
            dimension_semantics=("parallel", "arbitrary"),
            vmem_limit_bytes=vmem_limit,
        ),
        cost_estimate=cost,
    )(shift, labels2d, preds2d)

    # Tiny final combine (n_splits*3*1024 f32) + divide in XLA.
    sums = jnp.sum(partials, axis=(0, 2, 3))            # (3,): sse, s1c, s2c
    sse, s1c, s2c = sums[0], sums[1], sums[2]
    den = s2c - (s1c * s1c) / jnp.float32(total)        # == sum((l-mean)^2)
    return sse / den                                     # den==0 -> inf/nan (matches ref)


def r2_loss_reference(labels, preds):
    labels = labels.astype(jnp.float32)
    preds = preds.astype(jnp.float32)
    num = jnp.sum((preds - labels) ** 2)
    den = jnp.sum((labels - jnp.mean(labels)) ** 2)
    return num / den


if __name__ == "__main__":
    key = jax.random.PRNGKey(0)
    k1, k2, k3, k4 = jax.random.split(key, 4)

    # Small NCHW pair (lane-aligned size: no padding, single block, grid (1,1)).
    shape = (2, 4, 16, 16)
    labels = jax.random.normal(k1, shape, dtype=jnp.float32)
    preds = labels + 0.1 * jax.random.normal(k2, shape, dtype=jnp.float32)
    loss = r2_loss(labels, preds)
    jax.block_until_ready(loss)
    ref = r2_loss_reference(labels, preds)
    assert jnp.allclose(loss, ref, rtol=1e-4, atol=1e-7), (loss, ref)

    # Ragged, multi-block case with a large label offset: exercises the
    # 2-split grid, the partial-last-block element mask and the shifted stats.
    shape_b = (6, 5, 37, 29)   # 32190 elements, not a multiple of 128
    labels_b = 300.0 + jax.random.normal(k3, shape_b, dtype=jnp.float32)
    preds_b = labels_b + 0.05 * jax.random.normal(k4, shape_b, dtype=jnp.float32)
    loss_b = r2_loss(labels_b, preds_b)
    jax.block_until_ready(loss_b)
    ref_b = r2_loss_reference(labels_b, preds_b)
    assert jnp.allclose(loss_b, ref_b, rtol=1e-3, atol=1e-6), (loss_b, ref_b)

    print("KERNEL_OK")
</pallas_src>

<mosaic_0001>
module attributes {stable_mosaic.version = 11 : i64} {
  func.func @_r2_stats_kernel(%arg0: i32, %arg1: i32, %arg2: memref<1xf32, #tpu.memory_space<smem>>, %arg3: memref<16x128xf32, #tpu.memory_space<vmem>>, %arg4: memref<16x128xf32, #tpu.memory_space<vmem>>, %arg5: memref<1x3x8x128xf32, #tpu.memory_space<vmem>>, %arg6: memref<8x128xf32, #tpu.memory_space<vmem>>, %arg7: memref<8x128xf32, #tpu.memory_space<vmem>>, %arg8: memref<8x128xf32, #tpu.memory_space<vmem>>) attributes {dimension_semantics = [#tpu.dimension_semantics<parallel>, #tpu.dimension_semantics<arbitrary>], iteration_bounds = array<i64: 1, 1>, scalar_prefetch = 0 : i64, scratch_operands = 3 : i64, tpu.core_type = #tpu.core_type<tc>, window_params = [{transform_indices = @transform_0, window_bounds = array<i64: 1>}, {transform_indices = @transform_1, window_bounds = array<i64: 16, 128>}, {transform_indices = @transform_2, window_bounds = array<i64: 16, 128>}, {transform_indices = @transform_3, window_bounds = array<i64: 1, 3, 8, 128>}]} {
    %c1_i32 = arith.constant 1 : i32
    %0 = arith.muli %arg0, %c1_i32 : i32
    %1 = arith.addi %0, %arg1 : i32
    %c0_i32 = arith.constant 0 : i32
    %2 = arith.cmpi eq, %arg1, %c0_i32 : i32
    %3 = arith.extui %2 : i1 to i32
    %c0_i32_0 = arith.constant 0 : i32
    %4 = arith.cmpi ne, %3, %c0_i32_0 : i32
    scf.if %4 {
      %cst = arith.constant 0.000000e+00 : f32
      %15 = vector.broadcast %cst : f32 to vector<8x128xf32>
      %c0_7 = arith.constant 0 : index
      %c0_8 = arith.constant 0 : index
      %16 = vector.load %arg6[%c0_7, %c0_8] : memref<8x128xf32, #tpu.memory_space<vmem>>, vector<8x128xf32>
      tpu.vector_store %arg6[%c0_7, %c0_8], %15 {strides = array<i32>} : memref<8x128xf32, #tpu.memory_space<vmem>>, vector<8x128xf32>,
      %cst_9 = arith.constant 0.000000e+00 : f32
      %17 = vector.broadcast %cst_9 : f32 to vector<8x128xf32>
      %c0_10 = arith.constant 0 : index
      %c0_11 = arith.constant 0 : index
      %18 = vector.load %arg7[%c0_10, %c0_11] : memref<8x128xf32, #tpu.memory_space<vmem>>, vector<8x128xf32>
      tpu.vector_store %arg7[%c0_10, %c0_11], %17 {strides = array<i32>} : memref<8x128xf32, #tpu.memory_space<vmem>>, vector<8x128xf32>,
      %cst_12 = arith.constant 0.000000e+00 : f32
      %19 = vector.broadcast %cst_12 : f32 to vector<8x128xf32>
      %c0_13 = arith.constant 0 : index
      %c0_14 = arith.constant 0 : index
      %20 = vector.load %arg8[%c0_13, %c0_14] : memref<8x128xf32, #tpu.memory_space<vmem>>, vector<8x128xf32>
      tpu.vector_store %arg8[%c0_13, %c0_14], %19 {strides = array<i32>} : memref<8x128xf32, #tpu.memory_space<vmem>>, vector<8x128xf32>,
    } else {
    }
    %c0 = arith.constant 0 : index
    %5 = memref.load %arg2[%c0] : memref<1xf32, #tpu.memory_space<smem>>
    %c0_i32_1 = arith.constant 0 : i32
    %6 = arith.cmpi slt, %1, %c0_i32_1 : i32
    %7 = arith.extui %6 : i1 to i32
    %c0_i32_2 = arith.constant 0 : i32
    %8 = arith.cmpi ne, %7, %c0_i32_2 : i32
    scf.if %8 {
      %c0_7 = arith.constant 0 : index
      %c0_8 = arith.constant 0 : index
      %15 = vector.load %arg3[%c0_7, %c0_8] : memref<16x128xf32, #tpu.memory_space<vmem>>, vector<16x128xf32>
      %c0_9 = arith.constant 0 : index
      %c0_10 = arith.constant 0 : index
      %16 = vector.load %arg4[%c0_9, %c0_10] : memref<16x128xf32, #tpu.memory_space<vmem>>, vector<16x128xf32>
      %17 = arith.subf %16, %15 : vector<16x128xf32>
      %18 = vector.broadcast %5 : f32 to vector<16x128xf32>
      %19 = arith.subf %15, %18 : vector<16x128xf32>
      %20 = vector.shape_cast %17 : vector<16x128xf32> to vector<2x8x128xf32>
      %21 = vector.shape_cast %19 : vector<16x128xf32> to vector<2x8x128xf32>
      %c0_11 = arith.constant 0 : index
      %c0_12 = arith.constant 0 : index
      %22 = vector.load %arg6[%c0_11, %c0_12] : memref<8x128xf32, #tpu.memory_space<vmem>>, vector<8x128xf32>
      %23 = arith.mulf %20, %20 : vector<2x8x128xf32>
      %cst = arith.constant dense<0.000000e+00> : vector<8x128xf32>
      %24 = vector.multi_reduction <add>, %23, %cst [0] : vector<2x8x128xf32> to vector<8x128xf32>
      %25 = arith.addf %22, %24 : vector<8x128xf32>
      %c0_13 = arith.constant 0 : index
      %c0_14 = arith.constant 0 : index
      %26 = vector.load %arg6[%c0_13, %c0_14] : memref<8x128xf32, #tpu.memory_space<vmem>>, vector<8x128xf32>
      tpu.vector_store %arg6[%c0_13, %c0_14], %25 {strides = array<i32>} : memref<8x128xf32, #tpu.memory_space<vmem>>, vector<8x128xf32>,
      %c0_15 = arith.constant 0 : index
      %c0_16 = arith.constant 0 : index
      %27 = vector.load %arg7[%c0_15, %c0_16] : memref<8x128xf32, #tpu.memory_space<vmem>>, vector<8x128xf32>
      %cst_17 = arith.constant dense<0.000000e+00> : vector<8x128xf32>
      %28 = vector.multi_reduction <add>, %21, %cst_17 [0] : vector<2x8x128xf32> to vector<8x128xf32>
      %29 = arith.addf %27, %28 : vector<8x128xf32>
      %c0_18 = arith.constant 0 : index
      %c0_19 = arith.constant 0 : index
      %30 = vector.load %arg7[%c0_18, %c0_19] : memref<8x128xf32, #tpu.memory_space<vmem>>, vector<8x128xf32>
      tpu.vector_store %arg7[%c0_18, %c0_19], %29 {strides = array<i32>} : memref<8x128xf32, #tpu.memory_space<vmem>>, vector<8x128xf32>,
      %c0_20 = arith.constant 0 : index
      %c0_21 = arith.constant 0 : index
      %31 = vector.load %arg8[%c0_20, %c0_21] : memref<8x128xf32, #tpu.memory_space<vmem>>, vector<8x128xf32>
      %32 = arith.mulf %21, %21 : vector<2x8x128xf32>
      %cst_22 = arith.constant dense<0.000000e+00> : vector<8x128xf32>
      %33 = vector.multi_reduction <add>, %32, %cst_22 [0] : vector<2x8x128xf32> to vector<8x128xf32>
      %34 = arith.addf %31, %33 : vector<8x128xf32>
      %c0_23 = arith.constant 0 : index
      %c0_24 = arith.constant 0 : index
      %35 = vector.load %arg8[%c0_23, %c0_24] : memref<8x128xf32, #tpu.memory_space<vmem>>, vector<8x128xf32>
      tpu.vector_store %arg8[%c0_23, %c0_24], %34 {strides = array<i32>} : memref<8x128xf32, #tpu.memory_space<vmem>>, vector<8x128xf32>,
    } else {
    }
    %c0_i32_3 = arith.constant 0 : i32
    %9 = arith.cmpi sge, %1, %c0_i32_3 : i32
    %10 = arith.extui %9 : i1 to i32
    %c0_i32_4 = arith.constant 0 : i32
    %11 = arith.cmpi ne, %10, %c0_i32_4 : i32
    scf.if %11 {
      %15 = tpu.iota {dimensions = array<i32: 0>} : vector<16x128xi32>
      %c16_i32 = arith.constant 16 : i32
      %16 = arith.muli %1, %c16_i32 : i32
      %17 = vector.broadcast %16 : i32 to vector<16x128xi32>
      %18 = arith.addi %17, %15 : vector<16x128xi32>
      %c16_i32_7 = arith.constant 16 : i32
      %19 = vector.broadcast %c16_i32_7 : i32 to vector<16x128xi32>
      %20 = arith.cmpi slt, %18, %19 : vector<16x128xi32>
      %c0_8 = arith.constant 0 : index
      %c0_9 = arith.constant 0 : index
      %21 = vector.load %arg3[%c0_8, %c0_9] : memref<16x128xf32, #tpu.memory_space<vmem>>, vector<16x128xf32>
      %c0_10 = arith.constant 0 : index
      %c0_11 = arith.constant 0 : index
      %22 = vector.load %arg4[%c0_10, %c0_11] : memref<16x128xf32, #tpu.memory_space<vmem>>, vector<16x128xf32>
      %23 = arith.subf %22, %21 : vector<16x128xf32>
      %24 = vector.broadcast %5 : f32 to vector<16x128xf32>
      %25 = arith.subf %21, %24 : vector<16x128xf32>
      %cst = arith.constant 0.000000e+00 : f32
      %26 = vector.broadcast %cst : f32 to vector<16x128xf32>
      %27 = arith.select %20, %23, %26 : vector<16x128xi1>, vector<16x128xf32>
      %cst_12 = arith.constant 0.000000e+00 : f32
      %28 = vector.broadcast %cst_12 : f32 to vector<16x128xf32>
      %29 = arith.select %20, %25, %28 : vector<16x128xi1>, vector<16x128xf32>
      %30 = vector.shape_cast %27 : vector<16x128xf32> to vector<2x8x128xf32>
      %31 = vector.shape_cast %29 : vector<16x128xf32> to vector<2x8x128xf32>
      %c0_13 = arith.constant 0 : index
      %c0_14 = arith.constant 0 : index
      %32 = vector.load %arg6[%c0_13, %c0_14] : memref<8x128xf32, #tpu.memory_space<vmem>>, vector<8x128xf32>
      %33 = arith.mulf %30, %30 : vector<2x8x128xf32>
      %cst_15 = arith.constant dense<0.000000e+00> : vector<8x128xf32>
      %34 = vector.multi_reduction <add>, %33, %cst_15 [0] : vector<2x8x128xf32> to vector<8x128xf32>
      %35 = arith.addf %32, %34 : vector<8x128xf32>
      %c0_16 = arith.constant 0 : index
      %c0_17 = arith.constant 0 : index
      %36 = vector.load %arg6[%c0_16, %c0_17] : memref<8x128xf32, #tpu.memory_space<vmem>>, vector<8x128xf32>
      tpu.vector_store %arg6[%c0_16, %c0_17], %35 {strides = array<i32>} : memref<8x128xf32, #tpu.memory_space<vmem>>, vector<8x128xf32>,
      %c0_18 = arith.constant 0 : index
      %c0_19 = arith.constant 0 : index
      %37 = vector.load %arg7[%c0_18, %c0_19] : memref<8x128xf32, #tpu.memory_space<vmem>>, vector<8x128xf32>
      %cst_20 = arith.constant dense<0.000000e+00> : vector<8x128xf32>
      %38 = vector.multi_reduction <add>, %31, %cst_20 [0] : vector<2x8x128xf32> to vector<8x128xf32>
      %39 = arith.addf %37, %38 : vector<8x128xf32>
      %c0_21 = arith.constant 0 : index
      %c0_22 = arith.constant 0 : index
      %40 = vector.load %arg7[%c0_21, %c0_22] : memref<8x128xf32, #tpu.memory_space<vmem>>, vector<8x128xf32>
      tpu.vector_store %arg7[%c0_21, %c0_22], %39 {strides = array<i32>} : memref<8x128xf32, #tpu.memory_space<vmem>>, vector<8x128xf32>,
      %c0_23 = arith.constant 0 : index
      %c0_24 = arith.constant 0 : index
      %41 = vector.load %arg8[%c0_23, %c0_24] : memref<8x128xf32, #tpu.memory_space<vmem>>, vector<8x128xf32>
      %42 = arith.mulf %31, %31 : vector<2x8x128xf32>
      %cst_25 = arith.constant dense<0.000000e+00> : vector<8x128xf32>
      %43 = vector.multi_reduction <add>, %42, %cst_25 [0] : vector<2x8x128xf32> to vector<8x128xf32>
      %44 = arith.addf %41, %43 : vector<8x128xf32>
      %c0_26 = arith.constant 0 : index
      %c0_27 = arith.constant 0 : index
      %45 = vector.load %arg8[%c0_26, %c0_27] : memref<8x128xf32, #tpu.memory_space<vmem>>, vector<8x128xf32>
      tpu.vector_store %arg8[%c0_26, %c0_27], %44 {strides = array<i32>} : memref<8x128xf32, #tpu.memory_space<vmem>>, vector<8x128xf32>,
    } else {
    }
    %c0_i32_5 = arith.constant 0 : i32
    %12 = arith.cmpi eq, %arg1, %c0_i32_5 : i32
    %13 = arith.extui %12 : i1 to i32
    %c0_i32_6 = arith.constant 0 : i32
    %14 = arith.cmpi ne, %13, %c0_i32_6 : i32
    scf.if %14 {
      %c0_7 = arith.constant 0 : index
      %c0_8 = arith.constant 0 : index
      %15 = vector.load %arg6[%c0_7, %c0_8] : memref<8x128xf32, #tpu.memory_space<vmem>>, vector<8x128xf32>
      %c0_9 = arith.constant 0 : index
      %c0_10 = arith.constant 0 : index
      %c0_11 = arith.constant 0 : index
      %c0_12 = arith.constant 0 : index
      %16 = vector.load %arg5[%c0_9, %c0_10, %c0_11, %c0_12] : memref<1x3x8x128xf32, #tpu.memory_space<vmem>>, vector<1x1x8x128xf32>
      %17 = vector.shape_cast %16 : vector<1x1x8x128xf32> to vector<8x128xf32>
      %18 = vector.shape_cast %15 : vector<8x128xf32> to vector<1x1x8x128xf32>
      tpu.vector_store %arg5[%c0_9, %c0_10, %c0_11, %c0_12], %18 {strides = array<i32>} : memref<1x3x8x128xf32, #tpu.memory_space<vmem>>, vector<1x1x8x128xf32>,
      %c0_13 = arith.constant 0 : index
      %c0_14 = arith.constant 0 : index
      %19 = vector.load %arg7[%c0_13, %c0_14] : memref<8x128xf32, #tpu.memory_space<vmem>>, vector<8x128xf32>
      %c0_15 = arith.constant 0 : index
      %c1 = arith.constant 1 : index
      %c0_16 = arith.constant 0 : index
      %c0_17 = arith.constant 0 : index
      %20 = vector.load %arg5[%c0_15, %c1, %c0_16, %c0_17] : memref<1x3x8x128xf32, #tpu.memory_space<vmem>>, vector<1x1x8x128xf32>
      %21 = vector.shape_cast %20 : vector<1x1x8x128xf32> to vector<8x128xf32>
      %22 = vector.shape_cast %19 : vector<8x128xf32> to vector<1x1x8x128xf32>
      tpu.vector_store %arg5[%c0_15, %c1, %c0_16, %c0_17], %22 {strides = array<i32>} : memref<1x3x8x128xf32, #tpu.memory_space<vmem>>, vector<1x1x8x128xf32>,
      %c0_18 = arith.constant 0 : index
      %c0_19 = arith.constant 0 : index
      %23 = vector.load %arg8[%c0_18, %c0_19] : memref<8x128xf32, #tpu.memory_space<vmem>>, vector<8x128xf32>
      %c0_20 = arith.constant 0 : index
      %c2 = arith.constant 2 : index
      %c0_21 = arith.constant 0 : index
      %c0_22 = arith.constant 0 : index
      %24 = vector.load %arg5[%c0_20, %c2, %c0_21, %c0_22] : memref<1x3x8x128xf32, #tpu.memory_space<vmem>>, vector<1x1x8x128xf32>
      %25 = vector.shape_cast %24 : vector<1x1x8x128xf32> to vector<8x128xf32>
      %26 = vector.shape_cast %23 : vector<8x128xf32> to vector<1x1x8x128xf32>
      tpu.vector_store %arg5[%c0_20, %c2, %c0_21, %c0_22], %26 {strides = array<i32>} : memref<1x3x8x128xf32, #tpu.memory_space<vmem>>, vector<1x1x8x128xf32>,
    } else {
    }
    return
  }
  func.func @transform_0(%arg0: i32, %arg1: i32) -> i32 {
    %c0_i32 = arith.constant 0 : i32
    %c0_i32_0 = arith.constant 0 : i32
    return %c0_i32 : i32
  }
  func.func @transform_1(%arg0: i32, %arg1: i32) -> (i32, i32) {
    %c1_i32 = arith.constant 1 : i32
    %0 = arith.muli %arg0, %c1_i32 : i32
    %1 = arith.addi %0, %arg1 : i32
    %c0_i32 = arith.constant 0 : i32
    %2 = arith.minsi %1, %c0_i32 : i32
    %c0_i32_0 = arith.constant 0 : i32
    %c0_i32_1 = arith.constant 0 : i32
    return %2, %c0_i32_0 : i32, i32
  }
  func.func @transform_2(%arg0: i32, %arg1: i32) -> (i32, i32) {
    %c1_i32 = arith.constant 1 : i32
    %0 = arith.muli %arg0, %c1_i32 : i32
    %1 = arith.addi %0, %arg1 : i32
    %c0_i32 = arith.constant 0 : i32
    %2 = arith.minsi %1, %c0_i32 : i32
    %c0_i32_0 = arith.constant 0 : i32
    %c0_i32_1 = arith.constant 0 : i32
    return %2, %c0_i32_0 : i32, i32
  }
  func.func @transform_3(%arg0: i32, %arg1: i32) -> (i32, i32, i32, i32) {
    %c0_i32 = arith.constant 0 : i32
    %c0_i32_0 = arith.constant 0 : i32
    %c0_i32_1 = arith.constant 0 : i32
    %c0_i32_2 = arith.constant 0 : i32
    return %arg0, %c0_i32, %c0_i32_0, %c0_i32_1 : i32, i32, i32, i32
  }
}

</mosaic_0001>

<llo_original>
// kernel: tpu_custom_call.1
$region0: #{tpu_custom_call.1}
  #allocation0 [shape = 'u32[]', space=smem, size = 0x4, offset = 0x4, fixed_abs, tag = 'smem constant byte address 0x4 - core index']
  #allocation1 [shape = 'u32[144,128]{1,0:T(1,128)}', space=vmem, size = 0x12000, scoped, tag = 'internal scratch']
  #allocation2 [shape = 'f32[8,128]{1,0:T(8,128)}', space=vmem, size = 0x1000, scoped, tag = 'scratch operand']
  #allocation3 [shape = 'f32[8,128]{1,0:T(8,128)}', space=vmem, size = 0x1000, scoped, tag = 'scratch operand']
  #allocation4 [shape = 'f32[8,128]{1,0:T(8,128)}', space=vmem, size = 0x1000, scoped, tag = 'scratch operand']
  #allocation5 [shape = 'f32[1]{0:T(128)S(6)}', space=smem, size = 0x200, scoped, tag = 'scoped memory for tpu_custom_call.1']
  %s0 = inlined_call_operand.<no memory space> [shape: f32[1], index: 0, kind: input, shape index: {}]
  %s1 = inlined_call_operand.hbm [shape: f32[16,128], index: 1, kind: input, shape index: {}]
  %s2 = inlined_call_operand.hbm [shape: f32[16,128], index: 2, kind: input, shape index: {}]
  %s3 = inlined_call_operand.hbm [shape: f32[1,3,8,128], index: 3, kind: output, shape index: {}]
  %s4 = sld [smem:[#allocation0]]
  $region46: #{tpu_custom_call.1} parent=0
    _
  %s6 = ssub.s32 1, %s4
  %s7 = scalar_select 0, %s6, %s4
  %8 = sst [smem:[#allocation5]] %s0
  $region1: #{tpu_custom_call.1} parent=0
    #allocation6 [shape = 'u8[8192]{0}', space=vmem, size = 0x2000, scoped, tag = 'input window, operand 1, single buffered']
    #allocation7 [shape = 's32[1]{0}', space=sflag, size = 0x4, scoped, tag = 'scoped memory for tpu_custom_call.1']
    #allocation8 [shape = 's32[1]{0}', space=sflag, size = 0x4, scoped, tag = 'scoped memory for tpu_custom_call.1']
    #allocation9 [shape = 'u8[8192]{0}', space=vmem, size = 0x2000, scoped, tag = 'input window, operand 2, single buffered']
    #allocation10 [shape = 's32[1]{0}', space=sflag, size = 0x4, scoped, tag = 'scoped memory for tpu_custom_call.1']
    #allocation11 [shape = 'u8[12288]{0}', space=vmem, size = 0x3000, scoped, tag = 'output window, operand 0, single buffered']
    %9 = vsyncpa [#allocation7], 0
    %10 = vsyncpa [#allocation10], 0
    %11 = vsyncpa [#allocation8], 0
    // Predicated region
    $region2: #{tpu_custom_call.1} parent=1 // pred_check
      _
    $region3: #{tpu_custom_call.1} parent=1 // pred_check_branch
      %13 = sbr.rel (0) target = $region5
    $region4: #{tpu_custom_call.1} parent=1 // pred_region
      _
    $region5: #{tpu_custom_call.1} parent=1 // pred_fallthru
      _
    // Predicated region
    $region6: #{tpu_custom_call.1} parent=1 // pred_check
      _
    $region7: #{tpu_custom_call.1} parent=1 // pred_check_branch
      %15 = sbr.rel (0) target = $region9
    $region8: #{tpu_custom_call.1} parent=1 // pred_region
      %s16 = sadd.s32 0, 0
      %p17 = scmp.lt.s32.totalorder %s16, 0
      %s18 = scalar_select %p17, %s16, 0
      %s19 = smul.u32 2, %s18
      %s21 = ssub.s32 256, 256
      %22 = vsyncadd [#allocation7], %s21
      %s23 = smul.addr %s19, 128
      %s24 = scalar_lea.hbm %s1, %s23
      %s25 = sshll.u32 [#allocation6], 4
      %s26 = int_to_ptr.vmem [resolvable:$true] %s25
      %31 = dma.hbm_to_vmem [thread:$0]  %s24, 256, %s26, [#allocation7], 128, 128, 8
    $region9: #{tpu_custom_call.1} parent=1 // pred_fallthru
      _
    // Predicated region
    $region10: #{tpu_custom_call.1} parent=1 // pred_check
      _
    $region11: #{tpu_custom_call.1} parent=1 // pred_check_branch
      %33 = sbr.rel (0) target = $region13
    $region12: #{tpu_custom_call.1} parent=1 // pred_region
      %s34 = sadd.s32 0, 0
      %p35 = scmp.lt.s32.totalorder %s34, 0
      %s36 = scalar_select %p35, %s34, 0
      %s37 = smul.u32 2, %s36
      %s39 = ssub.s32 256, 256
      %40 = vsyncadd [#allocation10], %s39
      %s41 = smul.addr %s37, 128
      %s42 = scalar_lea.hbm %s2, %s41
      %s43 = sshll.u32 [#allocation9], 4
      %s44 = int_to_ptr.vmem [resolvable:$true] %s43
      %49 = dma.hbm_to_vmem [thread:$0]  %s42, 256, %s44, [#allocation10], 128, 128, 8
    $region13: #{tpu_custom_call.1} parent=1 // pred_fallthru
      _
    // Predicated region
    $region14: #{tpu_custom_call.1} parent=1 // pred_check
      _
    $region15: #{tpu_custom_call.1} parent=1 // pred_check_branch
      %51 = sbr.rel (0) target = $region17
    $region16: #{tpu_custom_call.1} parent=1 // pred_region
      %52 = dma.done [#allocation7], 256
    $region17: #{tpu_custom_call.1} parent=1 // pred_fallthru
      _
    // Predicated region
    $region18: #{tpu_custom_call.1} parent=1 // pred_check
      _
    $region19: #{tpu_custom_call.1} parent=1 // pred_check_branch
      %54 = sbr.rel (0) target = $region21
    $region20: #{tpu_custom_call.1} parent=1 // pred_region
      %55 = dma.done [#allocation10], 256
    $region21: #{tpu_custom_call.1} parent=1 // pred_fallthru
      _
    %s56 = sadd.s32 0, 0
    %p57 = scmp.lt.s32.totalorder %s56, 0
    %s58 = scalar_select %p57, %s56, 0
    %s59 = smul.u32 2, %s58
    %s60 = sadd.s32 0, 0
    %p61 = scmp.lt.s32.totalorder %s60, 0
    %s62 = scalar_select %p61, %s60, 0
    %s63 = smul.u32 2, %s62
    %s64 = sadd.s32 0, 0
    %p65 = scmp.eq.s32.totalorder 0, 0
    // Predicated region
    $region22: #{tpu_custom_call.1} parent=1 // pred_check
      %p66 = pneg %p65
    $region23: #{tpu_custom_call.1} parent=1 // pred_check_branch
      %68 = sbr.rel (%p66) target = $region25
    $region24: #{tpu_custom_call.1} parent=1 // pred_region
      %69 = vst [vmem:[#allocation2] sm:$0xff] 0.0
      %70 = vst [vmem:[#allocation3] sm:$0xff] 0.0
      %71 = vst [vmem:[#allocation4] sm:$0xff] 0.0
    $region25: #{tpu_custom_call.1} parent=1 // pred_fallthru
      _
    %s72 = sld [smem:[#allocation5]]
    %p73 = scmp.lt.s32.totalorder %s64, 0
    // Predicated region
    $region26: #{tpu_custom_call.1} parent=1 // pred_check
      %p74 = pneg %p73
    $region27: #{tpu_custom_call.1} parent=1 // pred_check_branch
      %76 = sbr.rel (%p74) target = $region29
    $region28: #{tpu_custom_call.1} parent=1 // pred_region
      %v77 = vld [vmem:[#allocation6] sm:$0xff]
      %v78 = vld [vmem:[#allocation6 + $0x8] sm:$0xff]
      %v79 = vld [vmem:[#allocation9] sm:$0xff]
      %v80 = vld [vmem:[#allocation9 + $0x8] sm:$0xff]
      %v81 = vsub.f32 %v79, %v77
      %v82 = vsub.f32 %v80, %v78
      %v83 = vstv %s72
      %v84 = vsub.f32 %v77, %v83
      %v85 = vsub.f32 %v78, %v83
      %v86 = vld [vmem:[#allocation2] sm:$0xff]
      %v87 = vmul.f32 %v81, %v81
      %v88 = vmul.f32 %v82, %v82
      %v89 = vadd.f32 %v87, %v88
      %v90 = vadd.f32 %v86, %v89
      %91 = vst [vmem:[#allocation2] sm:$0xff] %v90
      %v92 = vld [vmem:[#allocation3] sm:$0xff]
      %v93 = vadd.f32 %v84, %v85
      %v94 = vadd.f32 %v92, %v93
      %95 = vst [vmem:[#allocation3] sm:$0xff] %v94
      %v96 = vld [vmem:[#allocation4] sm:$0xff]
      %v97 = vmul.f32 %v84, %v84
      %v98 = vmul.f32 %v85, %v85
      %v99 = vadd.f32 %v97, %v98
      %v100 = vadd.f32 %v96, %v99
      %101 = vst [vmem:[#allocation4] sm:$0xff] %v100
    $region29: #{tpu_custom_call.1} parent=1 // pred_fallthru
      _
    %p102 = scmp.ge.s32.totalorder %s64, 0
    // Predicated region
    $region30: #{tpu_custom_call.1} parent=1 // pred_check
      %p103 = pneg %p102
    $region31: #{tpu_custom_call.1} parent=1 // pred_check_branch
      %105 = sbr.rel (%p103) target = $region33
    $region32: #{tpu_custom_call.1} parent=1 // pred_region
      %v106 = vlaneseq
      %v107 = vshrl.u32 %v106, 7
      %v108 = vadd.s32 %v107, 8
      %s109 = smul.u32 %s64, 16
      %v110 = vstv %s109
      %v111 = vadd.s32 %v110, %v107
      %v112 = vadd.s32 %v110, %v108
      %vm113 = vcmp.lt.s32.totalorder %v111, 16
      %vm114 = vcmp.lt.s32.totalorder %v112, 16
      %v115 = vld [vmem:[#allocation6] sm:$0xff]
      %v116 = vld [vmem:[#allocation6 + $0x8] sm:$0xff]
      %v117 = vld [vmem:[#allocation9] sm:$0xff]
      %v118 = vld [vmem:[#allocation9 + $0x8] sm:$0xff]
      %v119 = vsub.f32 %v117, %v115
      %v120 = vsub.f32 %v118, %v116
      %v121 = vstv %s72
      %v122 = vsub.f32 %v115, %v121
      %v123 = vsub.f32 %v116, %v121
      %v124 = vsel %vm113, %v119, 0.0
      %v125 = vsel %vm114, %v120, 0.0
      %v126 = vsel %vm113, %v122, 0.0
      %v127 = vsel %vm114, %v123, 0.0
      %v128 = vld [vmem:[#allocation2] sm:$0xff]
      %v129 = vmul.f32 %v124, %v124
      %v130 = vmul.f32 %v125, %v125
      %v131 = vadd.f32 %v129, %v130
      %v132 = vadd.f32 %v128, %v131
      %133 = vst [vmem:[#allocation2] sm:$0xff] %v132
      %v134 = vld [vmem:[#allocation3] sm:$0xff]
      %v135 = vadd.f32 %v126, %v127
      %v136 = vadd.f32 %v134, %v135
      %137 = vst [vmem:[#allocation3] sm:$0xff] %v136
      %v138 = vld [vmem:[#allocation4] sm:$0xff]
      %v139 = vmul.f32 %v126, %v126
      %v140 = vmul.f32 %v127, %v127
      %v141 = vadd.f32 %v139, %v140
      %v142 = vadd.f32 %v138, %v141
      %143 = vst [vmem:[#allocation4] sm:$0xff] %v142
    $region33: #{tpu_custom_call.1} parent=1 // pred_fallthru
      _
    // Predicated region
    $region34: #{tpu_custom_call.1} parent=1 // pred_check
      %p144 = pneg %p65
    $region35: #{tpu_custom_call.1} parent=1 // pred_check_branch
      %146 = sbr.rel (%p144) target = $region37
    $region36: #{tpu_custom_call.1} parent=1 // pred_region
      %v147 = vld [vmem:[#allocation2] sm:$0xff]
      %148 = vst [vmem:[#allocation11] sm:$0xff] %v147
      %v149 = vld [vmem:[#allocation3] sm:$0xff]
      %s150 = scalar_lea.vmem [#allocation11], 8
      %151 = vst [vmem:[%s150] sm:$0xff] %v149
      %v152 = vld [vmem:[#allocation4] sm:$0xff]
      %s153 = scalar_lea.vmem [#allocation11], 16
      %154 = vst [vmem:[%s153] sm:$0xff] %v152
    $region37: #{tpu_custom_call.1} parent=1 // pred_fallthru
      _
    // Predicated region
    $region38: #{tpu_custom_call.1} parent=1 // pred_check
      _
    $region39: #{tpu_custom_call.1} parent=1 // pred_check_branch
      %156 = sbr.rel (0) target = $region41
    $region40: #{tpu_custom_call.1} parent=1 // pred_region
      %s158 = ssub.s32 384, 384
      %159 = vsyncadd [#allocation8], %s158
      %s160 = sshll.u32 [#allocation11], 4
      %s161 = int_to_ptr.vmem [resolvable:$true] %s160
      %166 = dma.vmem_to_hbm [thread:$0]  %s161, 384, %s3, [#allocation8], 128, 128, 8
    $region41: #{tpu_custom_call.1} parent=1 // pred_fallthru
      _
    // Predicated region
    $region42: #{tpu_custom_call.1} parent=1 // pred_check
      _
    $region43: #{tpu_custom_call.1} parent=1 // pred_check_branch
      %168 = sbr.rel (0) target = $region45
    $region44: #{tpu_custom_call.1} parent=1 // pred_region
      %169 = dma.done [#allocation8], 384
    $region45: #{tpu_custom_call.1} parent=1 // pred_fallthru
      _
    %170 = vsyncpa [#allocation7], 1
    %171 = vsyncpa [#allocation10], 1
    %172 = vsyncpa [#allocation8], 1

</llo_original>
